<compile_context>
chip_gen: v5e
topology: v5e:2x2
jax: 0.10.0
libtpu: 0.0.40
codegen_flags: <defaults>
</compile_context>

<pallas_src>
import math
import functools

import jax
import jax.numpy as jnp
from jax import lax
from jax.experimental import pallas as pl
from jax.experimental.pallas import tpu as pltpu


def _attend_one_head(qg, kg, vg, bias):
    # qg: (Tq, Dh), kg/vg: (Lk, Dh), bias: (Tq, Lk) f32 or None.
    # Native-dtype operands on the MXU; f32 accumulation.
    s = lax.dot_general(qg, kg, (((1,), (1,)), ((), ())),
                        preferred_element_type=jnp.float32)          # (Tq, Lk)
    if bias is not None:
        s = s + bias
    m = jnp.max(s, axis=-1, keepdims=True)
    p = jnp.exp(s - m)                                               # unnormalized
    denom = jnp.sum(p, axis=-1, keepdims=True)                       # (Tq, 1)
    o = jnp.dot(p.astype(vg.dtype), vg,
                preferred_element_type=jnp.float32)                  # (Tq, Dh)
    # Deferred softmax normalization on the small (Tq, Dh) output.
    return o * pl.reciprocal(denom, approx=False)


def _mha_body(q_ref, k_ref, v_ref, m_ref, o_ref, scale, group, head_dim):
    # q_ref/o_ref: (1, Tq, group*Dh); k_ref/v_ref: (1, Lk, group*Dh)
    # m_ref: (1, Tq, Lk) int8 (1 = masked out), or None.
    q = q_ref[0] * jnp.asarray(scale, dtype=q_ref.dtype)   # fold 1/sqrt(Dh) into q
    k = k_ref[0]
    v = v_ref[0]
    bias = None
    if m_ref is not None:
        # Additive bias computed once per grid step, shared across the head group.
        bias = m_ref[0].astype(jnp.float32) * jnp.float32(-10000.0)
    outs = []
    for g in range(group):
        lo = g * head_dim
        hi = lo + head_dim
        outs.append(_attend_one_head(q[:, lo:hi], k[:, lo:hi], v[:, lo:hi], bias))
    o = outs[0] if group == 1 else jnp.concatenate(outs, axis=-1)
    o_ref[0] = o.astype(o_ref.dtype)


def _mha_kernel(q_ref, k_ref, v_ref, o_ref, *, scale, group, head_dim):
    _mha_body(q_ref, k_ref, v_ref, None, o_ref, scale, group, head_dim)


def _mha_kernel_masked(q_ref, k_ref, v_ref, m_ref, o_ref, *, scale, group, head_dim):
    _mha_body(q_ref, k_ref, v_ref, m_ref, o_ref, scale, group, head_dim)


def _pick_head_group(heads: int, head_dim: int) -> int:
    """Smallest divisor of `heads` whose block width is a multiple of 128 lanes;
    otherwise all heads (block width == dims, i.e. the full last dim)."""
    for g in range(1, heads + 1):
        if heads % g == 0 and (g * head_dim) % 128 == 0:
            return g
    return heads


def multi_head_attention(q, k, v, mask=None, *, heads: int):
    """Pallas TPU multi-head attention matching the PyTorch module's forward."""
    *batch, lq, d = q.shape
    lk = k.shape[-2]
    assert d % heads == 0, "dims must be divisible by heads"
    dh = d // heads
    b = 1
    for dim in batch:
        b *= dim

    # Collapse leading batch dims (contiguous reshape; no transpose, no HBM pass).
    q3 = q.reshape(b, lq, d)
    k3 = k.reshape(b, lk, d)
    v3 = v.reshape(b, lk, d)

    group = _pick_head_group(heads, dh)
    gd = group * dh

    # Query tile: full Lq when small, else 256 (VMEM-safe on v5e/v7x; v6e has slack).
    if lq <= 256:
        block_q, padded_lq = lq, lq
    else:
        block_q = 256
        padded_lq = -(-lq // block_q) * block_q
    pad_q = padded_lq - lq
    if pad_q:
        q3 = jnp.pad(q3, ((0, 0), (0, pad_q), (0, 0)))

    scale = 1.0 / math.sqrt(dh)
    grid = (b, heads // group, padded_lq // block_q)

    q_spec = pl.BlockSpec((1, block_q, gd), lambda bi, gi, qi: (bi, qi, gi))
    kv_spec = pl.BlockSpec((1, lk, gd), lambda bi, gi, qi: (bi, 0, gi))
    o_spec = pl.BlockSpec((1, block_q, gd), lambda bi, gi, qi: (bi, qi, gi))

    compiler_params = pltpu.CompilerParams(
        # batch & head-group axes shard across cores; K/V stays resident across
        # the innermost q-tile axis.
        dimension_semantics=("parallel", "parallel", "arbitrary"),
        vmem_limit_bytes=48 * 1024 * 1024,   # explicit budget (v7x has 64 MiB total)
    )
    out_shape = jax.ShapeDtypeStruct((b, padded_lq, d), q.dtype)

    if mask is None:
        kern = functools.partial(_mha_kernel, scale=scale, group=group, head_dim=dh)
        out = pl.pallas_call(
            kern,
            out_shape=out_shape,
            grid=grid,
            in_specs=[q_spec, kv_spec, kv_spec],
            out_specs=o_spec,
            compiler_params=compiler_params,
        )(q3, k3, v3)
    else:
        # Keep the mask small in HBM: int8, per-batch (shared by every head group).
        mask_i8 = jnp.broadcast_to(mask, tuple(batch) + (lq, lk))
        mask_i8 = mask_i8.reshape(b, lq, lk).astype(jnp.int8)
        if pad_q:
            mask_i8 = jnp.pad(mask_i8, ((0, 0), (0, pad_q), (0, 0)))
        m_spec = pl.BlockSpec((1, block_q, lk), lambda bi, gi, qi: (bi, qi, 0))
        kern = functools.partial(_mha_kernel_masked, scale=scale, group=group,
                                 head_dim=dh)
        out = pl.pallas_call(
            kern,
            out_shape=out_shape,
            grid=grid,
            in_specs=[q_spec, kv_spec, kv_spec, m_spec],
            out_specs=o_spec,
            compiler_params=compiler_params,
        )(q3, k3, v3, mask_i8)

    if pad_q:
        out = out[:, :lq]
    # Heads were never moved out of the last dim, so this reshape is free.
    return out.reshape(tuple(batch) + (lq, d))


def _reference_mha(q, k, v, mask, heads):
    """Pure-JAX reference mirroring the PyTorch module exactly (no dropout)."""
    *batch, lq, d = q.shape
    dh = d // heads
    lk = k.shape[-2]
    qh = q.reshape(*batch, lq, heads, dh).swapaxes(-3, -2)
    kh = k.reshape(*batch, lk, heads, dh).swapaxes(-3, -2)
    vh = v.reshape(*batch, lk, heads, dh).swapaxes(-3, -2)
    s = jnp.einsum('...qd,...kd->...qk', qh, kh) / math.sqrt(dh)
    if mask is not None:
        s = s + mask[..., None, :, :].astype(s.dtype) * (-10000.0)
    p = jax.nn.softmax(s, axis=-1)
    o = jnp.einsum('...qk,...kd->...qd', p, vh)
    return o.swapaxes(-3, -2).reshape(*batch, lq, heads * dh)


if __name__ == "__main__":
    keys = jax.random.split(jax.random.PRNGKey(0), 8)

    # Shapes consistent with the module: dims=32, heads=4 -> head_dim=8.
    heads = 4
    B, Lq, Lk, D = 2, 8, 8, 32
    q = jax.random.normal(keys[0], (B, Lq, D), dtype=jnp.float32)
    k = jax.random.normal(keys[1], (B, Lk, D), dtype=jnp.float32)
    v = jax.random.normal(keys[2], (B, Lk, D), dtype=jnp.float32)
    mask = jax.random.bernoulli(keys[3], 0.3, (B, Lq, Lk))  # bool, True = masked out

    # masked path
    out = multi_head_attention(q, k, v, mask, heads=heads)
    jax.block_until_ready(out)
    ref = _reference_mha(q, k, v, mask, heads)
    assert out.shape == (B, Lq, D) and out.dtype == q.dtype
    assert jnp.allclose(out, ref, atol=1e-5, rtol=1e-5), "masked MHA mismatch vs reference"

    # unmasked path
    out_nm = multi_head_attention(q, k, v, None, heads=heads)
    jax.block_until_ready(out_nm)
    ref_nm = _reference_mha(q, k, v, None, heads)
    assert jnp.allclose(out_nm, ref_nm, atol=1e-5, rtol=1e-5), "unmasked MHA mismatch vs reference"

    # A lane-dense configuration (group*head_dim == 128) exercising the grouped path.
    heads2 = 2
    B2, L2, D2 = 1, 128, 256
    q2 = jax.random.normal(keys[4], (B2, L2, D2), dtype=jnp.float32)
    k2 = jax.random.normal(keys[5], (B2, L2, D2), dtype=jnp.float32)
    v2 = jax.random.normal(keys[6], (B2, L2, D2), dtype=jnp.float32)
    mask2 = jax.random.bernoulli(keys[7], 0.2, (B2, L2, L2))
    out2 = multi_head_attention(q2, k2, v2, mask2, heads=heads2)
    jax.block_until_ready(out2)
    ref2 = _reference_mha(q2, k2, v2, mask2, heads2)
    assert jnp.allclose(out2, ref2, atol=1e-4, rtol=1e-4), "grouped MHA mismatch vs reference"

    print("KERNEL_OK")
</pallas_src>

<mosaic_0001>
module attributes {stable_mosaic.version = 11 : i64} {
  func.func @_mha_kernel_masked(%arg0: i32, %arg1: i32, %arg2: i32, %arg3: memref<1x8x32xf32, #tpu.memory_space<vmem>>, %arg4: memref<1x8x32xf32, #tpu.memory_space<vmem>>, %arg5: memref<1x8x32xf32, #tpu.memory_space<vmem>>, %arg6: memref<1x8x8xi8, #tpu.memory_space<vmem>>, %arg7: memref<1x8x32xf32, #tpu.memory_space<vmem>>) attributes {dimension_semantics = [#tpu.dimension_semantics<parallel>, #tpu.dimension_semantics<parallel>, #tpu.dimension_semantics<arbitrary>], iteration_bounds = array<i64: 2, 1, 1>, scalar_prefetch = 0 : i64, scratch_operands = 0 : i64, tpu.core_type = #tpu.core_type<tc>, window_params = [{transform_indices = @transform_0, window_bounds = array<i64: 1, 8, 32>}, {transform_indices = @transform_1, window_bounds = array<i64: 1, 8, 32>}, {transform_indices = @transform_2, window_bounds = array<i64: 1, 8, 32>}, {transform_indices = @transform_3, window_bounds = array<i64: 1, 8, 8>}, {transform_indices = @transform_4, window_bounds = array<i64: 1, 8, 32>}]} {
    %c0 = arith.constant 0 : index
    %c0_0 = arith.constant 0 : index
    %c0_1 = arith.constant 0 : index
    %0 = vector.load %arg3[%c0, %c0_0, %c0_1] : memref<1x8x32xf32, #tpu.memory_space<vmem>>, vector<1x8x32xf32>
    %1 = vector.shape_cast %0 : vector<1x8x32xf32> to vector<8x32xf32>
    %cst = arith.constant 0.353553385 : f32
    %2 = vector.broadcast %cst : f32 to vector<8x32xf32>
    %3 = arith.mulf %1, %2 : vector<8x32xf32>
    %c0_2 = arith.constant 0 : index
    %c0_3 = arith.constant 0 : index
    %c0_4 = arith.constant 0 : index
    %4 = vector.load %arg4[%c0_2, %c0_3, %c0_4] : memref<1x8x32xf32, #tpu.memory_space<vmem>>, vector<1x8x32xf32>
    %5 = vector.shape_cast %4 : vector<1x8x32xf32> to vector<8x32xf32>
    %c0_5 = arith.constant 0 : index
    %c0_6 = arith.constant 0 : index
    %c0_7 = arith.constant 0 : index
    %6 = vector.load %arg5[%c0_5, %c0_6, %c0_7] : memref<1x8x32xf32, #tpu.memory_space<vmem>>, vector<1x8x32xf32>
    %7 = vector.shape_cast %6 : vector<1x8x32xf32> to vector<8x32xf32>
    %c0_8 = arith.constant 0 : index
    %c0_9 = arith.constant 0 : index
    %c0_10 = arith.constant 0 : index
    %8 = vector.load %arg6[%c0_8, %c0_9, %c0_10] : memref<1x8x8xi8, #tpu.memory_space<vmem>>, vector<1x8x8xi8>
    %9 = vector.shape_cast %8 : vector<1x8x8xi8> to vector<8x8xi8>
    %10 = arith.sitofp %9 : vector<8x8xi8> to vector<8x8xf32>
    %cst_11 = arith.constant -1.000000e+04 : f32
    %11 = vector.broadcast %cst_11 : f32 to vector<8x8xf32>
    %12 = arith.mulf %10, %11 : vector<8x8xf32>
    %13 = vector.extract_strided_slice %3 {offsets = [0, 0], sizes = [8, 8], strides = [1, 1]} : vector<8x32xf32> to vector<8x8xf32>
    %14 = vector.extract_strided_slice %5 {offsets = [0, 0], sizes = [8, 8], strides = [1, 1]} : vector<8x32xf32> to vector<8x8xf32>
    %15 = vector.extract_strided_slice %7 {offsets = [0, 0], sizes = [8, 8], strides = [1, 1]} : vector<8x32xf32> to vector<8x8xf32>
    %cst_12 = arith.constant dense<0.000000e+00> : vector<8x8xf32>
    %16 = tpu.matmul %13, %14, %cst_12 {dimension_numbers = #tpu.dot_dimension_numbers<[1], [1], [0], [0], [0, 0, 1, 0], [], []>} : vector<8x8xf32>, vector<8x8xf32>, vector<8x8xf32> -> vector<8x8xf32>
    %17 = arith.addf %16, %12 : vector<8x8xf32>
    %cst_13 = arith.constant dense<0xFF800000> : vector<8xf32>
    %18 = vector.multi_reduction <maximumf>, %17, %cst_13 [1] : vector<8x8xf32> to vector<8xf32>
    %19 = vector.shape_cast %18 : vector<8xf32> to vector<8x1xf32>
    %20 = vector.broadcast %19 : vector<8x1xf32> to vector<8x8xf32>
    %21 = arith.subf %17, %20 : vector<8x8xf32>
    %22 = math.exp %21 : vector<8x8xf32>
    %cst_14 = arith.constant dense<0.000000e+00> : vector<8xf32>
    %23 = vector.multi_reduction <add>, %22, %cst_14 [1] : vector<8x8xf32> to vector<8xf32>
    %24 = vector.shape_cast %23 : vector<8xf32> to vector<8x1xf32>
    %cst_15 = arith.constant dense<0.000000e+00> : vector<8x8xf32>
    %25 = tpu.matmul %22, %15, %cst_15 {dimension_numbers = #tpu.dot_dimension_numbers<[1], [0], [0], [1], [0, 0, 1, 1], [], []>} : vector<8x8xf32>, vector<8x8xf32>, vector<8x8xf32> -> vector<8x8xf32>
    %26 = tpu.reciprocal %24 : vector<8x1xf32> -> vector<8x1xf32>
    %27 = vector.broadcast %26 : vector<8x1xf32> to vector<8x8xf32>
    %28 = arith.mulf %25, %27 : vector<8x8xf32>
    %29 = vector.extract_strided_slice %3 {offsets = [0, 8], sizes = [8, 8], strides = [1, 1]} : vector<8x32xf32> to vector<8x8xf32>
    %30 = vector.extract_strided_slice %5 {offsets = [0, 8], sizes = [8, 8], strides = [1, 1]} : vector<8x32xf32> to vector<8x8xf32>
    %31 = vector.extract_strided_slice %7 {offsets = [0, 8], sizes = [8, 8], strides = [1, 1]} : vector<8x32xf32> to vector<8x8xf32>
    %cst_16 = arith.constant dense<0.000000e+00> : vector<8x8xf32>
    %32 = tpu.matmul %29, %30, %cst_16 {dimension_numbers = #tpu.dot_dimension_numbers<[1], [1], [0], [0], [0, 0, 1, 0], [], []>} : vector<8x8xf32>, vector<8x8xf32>, vector<8x8xf32> -> vector<8x8xf32>
    %33 = arith.addf %32, %12 : vector<8x8xf32>
    %cst_17 = arith.constant dense<0xFF800000> : vector<8xf32>
    %34 = vector.multi_reduction <maximumf>, %33, %cst_17 [1] : vector<8x8xf32> to vector<8xf32>
    %35 = vector.shape_cast %34 : vector<8xf32> to vector<8x1xf32>
    %36 = vector.broadcast %35 : vector<8x1xf32> to vector<8x8xf32>
    %37 = arith.subf %33, %36 : vector<8x8xf32>
    %38 = math.exp %37 : vector<8x8xf32>
    %cst_18 = arith.constant dense<0.000000e+00> : vector<8xf32>
    %39 = vector.multi_reduction <add>, %38, %cst_18 [1] : vector<8x8xf32> to vector<8xf32>
    %40 = vector.shape_cast %39 : vector<8xf32> to vector<8x1xf32>
    %cst_19 = arith.constant dense<0.000000e+00> : vector<8x8xf32>
    %41 = tpu.matmul %38, %31, %cst_19 {dimension_numbers = #tpu.dot_dimension_numbers<[1], [0], [0], [1], [0, 0, 1, 1], [], []>} : vector<8x8xf32>, vector<8x8xf32>, vector<8x8xf32> -> vector<8x8xf32>
    %42 = tpu.reciprocal %40 : vector<8x1xf32> -> vector<8x1xf32>
    %43 = vector.broadcast %42 : vector<8x1xf32> to vector<8x8xf32>
    %44 = arith.mulf %41, %43 : vector<8x8xf32>
    %45 = vector.extract_strided_slice %3 {offsets = [0, 16], sizes = [8, 8], strides = [1, 1]} : vector<8x32xf32> to vector<8x8xf32>
    %46 = vector.extract_strided_slice %5 {offsets = [0, 16], sizes = [8, 8], strides = [1, 1]} : vector<8x32xf32> to vector<8x8xf32>
    %47 = vector.extract_strided_slice %7 {offsets = [0, 16], sizes = [8, 8], strides = [1, 1]} : vector<8x32xf32> to vector<8x8xf32>
    %cst_20 = arith.constant dense<0.000000e+00> : vector<8x8xf32>
    %48 = tpu.matmul %45, %46, %cst_20 {dimension_numbers = #tpu.dot_dimension_numbers<[1], [1], [0], [0], [0, 0, 1, 0], [], []>} : vector<8x8xf32>, vector<8x8xf32>, vector<8x8xf32> -> vector<8x8xf32>
    %49 = arith.addf %48, %12 : vector<8x8xf32>
    %cst_21 = arith.constant dense<0xFF800000> : vector<8xf32>
    %50 = vector.multi_reduction <maximumf>, %49, %cst_21 [1] : vector<8x8xf32> to vector<8xf32>
    %51 = vector.shape_cast %50 : vector<8xf32> to vector<8x1xf32>
    %52 = vector.broadcast %51 : vector<8x1xf32> to vector<8x8xf32>
    %53 = arith.subf %49, %52 : vector<8x8xf32>
    %54 = math.exp %53 : vector<8x8xf32>
    %cst_22 = arith.constant dense<0.000000e+00> : vector<8xf32>
    %55 = vector.multi_reduction <add>, %54, %cst_22 [1] : vector<8x8xf32> to vector<8xf32>
    %56 = vector.shape_cast %55 : vector<8xf32> to vector<8x1xf32>
    %cst_23 = arith.constant dense<0.000000e+00> : vector<8x8xf32>
    %57 = tpu.matmul %54, %47, %cst_23 {dimension_numbers = #tpu.dot_dimension_numbers<[1], [0], [0], [1], [0, 0, 1, 1], [], []>} : vector<8x8xf32>, vector<8x8xf32>, vector<8x8xf32> -> vector<8x8xf32>
    %58 = tpu.reciprocal %56 : vector<8x1xf32> -> vector<8x1xf32>
    %59 = vector.broadcast %58 : vector<8x1xf32> to vector<8x8xf32>
    %60 = arith.mulf %57, %59 : vector<8x8xf32>
    %61 = vector.extract_strided_slice %3 {offsets = [0, 24], sizes = [8, 8], strides = [1, 1]} : vector<8x32xf32> to vector<8x8xf32>
    %62 = vector.extract_strided_slice %5 {offsets = [0, 24], sizes = [8, 8], strides = [1, 1]} : vector<8x32xf32> to vector<8x8xf32>
    %63 = vector.extract_strided_slice %7 {offsets = [0, 24], sizes = [8, 8], strides = [1, 1]} : vector<8x32xf32> to vector<8x8xf32>
    %cst_24 = arith.constant dense<0.000000e+00> : vector<8x8xf32>
    %64 = tpu.matmul %61, %62, %cst_24 {dimension_numbers = #tpu.dot_dimension_numbers<[1], [1], [0], [0], [0, 0, 1, 0], [], []>} : vector<8x8xf32>, vector<8x8xf32>, vector<8x8xf32> -> vector<8x8xf32>
    %65 = arith.addf %64, %12 : vector<8x8xf32>
    %cst_25 = arith.constant dense<0xFF800000> : vector<8xf32>
    %66 = vector.multi_reduction <maximumf>, %65, %cst_25 [1] : vector<8x8xf32> to vector<8xf32>
    %67 = vector.shape_cast %66 : vector<8xf32> to vector<8x1xf32>
    %68 = vector.broadcast %67 : vector<8x1xf32> to vector<8x8xf32>
    %69 = arith.subf %65, %68 : vector<8x8xf32>
    %70 = math.exp %69 : vector<8x8xf32>
    %cst_26 = arith.constant dense<0.000000e+00> : vector<8xf32>
    %71 = vector.multi_reduction <add>, %70, %cst_26 [1] : vector<8x8xf32> to vector<8xf32>
    %72 = vector.shape_cast %71 : vector<8xf32> to vector<8x1xf32>
    %cst_27 = arith.constant dense<0.000000e+00> : vector<8x8xf32>
    %73 = tpu.matmul %70, %63, %cst_27 {dimension_numbers = #tpu.dot_dimension_numbers<[1], [0], [0], [1], [0, 0, 1, 1], [], []>} : vector<8x8xf32>, vector<8x8xf32>, vector<8x8xf32> -> vector<8x8xf32>
    %74 = tpu.reciprocal %72 : vector<8x1xf32> -> vector<8x1xf32>
    %75 = vector.broadcast %74 : vector<8x1xf32> to vector<8x8xf32>
    %76 = arith.mulf %73, %75 : vector<8x8xf32>
    %77 = tpu.concatenate %28, %44, %60, %76 in 1 : vector<8x8xf32>, vector<8x8xf32>, vector<8x8xf32>, vector<8x8xf32> -> vector<8x32xf32>
    %c0_28 = arith.constant 0 : index
    %c0_29 = arith.constant 0 : index
    %c0_30 = arith.constant 0 : index
    %78 = vector.load %arg7[%c0_28, %c0_29, %c0_30] : memref<1x8x32xf32, #tpu.memory_space<vmem>>, vector<1x8x32xf32>
    %79 = vector.shape_cast %78 : vector<1x8x32xf32> to vector<8x32xf32>
    %80 = vector.shape_cast %77 : vector<8x32xf32> to vector<1x8x32xf32>
    tpu.vector_store %arg7[%c0_28, %c0_29, %c0_30], %80 {strides = array<i32>} : memref<1x8x32xf32, #tpu.memory_space<vmem>>, vector<1x8x32xf32>,
    return
  }
  func.func @transform_0(%arg0: i32, %arg1: i32, %arg2: i32) -> (i32, i32, i32) {
    %c0_i32 = arith.constant 0 : i32
    return %arg0, %arg2, %arg1 : i32, i32, i32
  }
  func.func @transform_1(%arg0: i32, %arg1: i32, %arg2: i32) -> (i32, i32, i32) {
    %c0_i32 = arith.constant 0 : i32
    %c0_i32_0 = arith.constant 0 : i32
    return %arg0, %c0_i32, %arg1 : i32, i32, i32
  }
  func.func @transform_2(%arg0: i32, %arg1: i32, %arg2: i32) -> (i32, i32, i32) {
    %c0_i32 = arith.constant 0 : i32
    %c0_i32_0 = arith.constant 0 : i32
    return %arg0, %c0_i32, %arg1 : i32, i32, i32
  }
  func.func @transform_3(%arg0: i32, %arg1: i32, %arg2: i32) -> (i32, i32, i32) {
    %c0_i32 = arith.constant 0 : i32
    %c0_i32_0 = arith.constant 0 : i32
    return %arg0, %arg2, %c0_i32 : i32, i32, i32
  }
  func.func @transform_4(%arg0: i32, %arg1: i32, %arg2: i32) -> (i32, i32, i32) {
    %c0_i32 = arith.constant 0 : i32
    return %arg0, %arg2, %arg1 : i32, i32, i32
  }
}

</mosaic_0001>

<llo_original>
// kernel: tpu_custom_call.1
$region0: #{tpu_custom_call.1}
  #allocation0 [shape = 'u32[]', space=smem, size = 0x4, offset = 0x4, fixed_abs, tag = 'smem constant byte address 0x4 - core index']
  #allocation1 [shape = 'u32[72,128]{1,0:T(1,128)}', space=vmem, size = 0x9000, scoped, tag = 'internal scratch']
  %s0 = inlined_call_operand.hbm [shape: f32[2,8,32], index: 0, kind: input, shape index: {}]
  %s1 = inlined_call_operand.hbm [shape: f32[2,8,32], index: 1, kind: input, shape index: {}]
  %s2 = inlined_call_operand.hbm [shape: f32[2,8,32], index: 2, kind: input, shape index: {}]
  %s3 = inlined_call_operand.hbm [shape: s8[2,8,8], index: 3, kind: input, shape index: {}]
  %s4 = inlined_call_operand.hbm [shape: f32[2,8,32], index: 4, kind: output, shape index: {}]
  %s5 = sld [smem:[#allocation0]]
  $region65: #{tpu_custom_call.1} parent=0
    _
  %s7 = ssub.s32 1, %s5
  %s8 = scalar_select 0, %s7, %s5
  $region1: #{tpu_custom_call.1} parent=0
    #allocation2 [shape = 'u8[8192]{0}', space=vmem, size = 0x2000, scoped, tag = 'input window, operand 0']
    #allocation3 [shape = 's32[2]{0}', space=sflag, size = 0x8, scoped, tag = 'scoped memory for tpu_custom_call.1']
    #allocation4 [shape = 's32[2]{0}', space=sflag, size = 0x8, scoped, tag = 'scoped memory for tpu_custom_call.1']
    #allocation5 [shape = 'u8[8192]{0}', space=vmem, size = 0x2000, scoped, tag = 'input window, operand 1']
    #allocation6 [shape = 's32[2]{0}', space=sflag, size = 0x8, scoped, tag = 'scoped memory for tpu_custom_call.1']
    #allocation7 [shape = 'u8[8192]{0}', space=vmem, size = 0x2000, scoped, tag = 'input window, operand 2']
    #allocation8 [shape = 'u8[2048]{0}', space=vmem, size = 0x800, scoped, tag = 'input window, operand 3']
    #allocation9 [shape = 's32[2]{0}', space=sflag, size = 0x8, scoped, tag = 'scoped memory for tpu_custom_call.1']
    #allocation10 [shape = 'u8[8192]{0}', space=vmem, size = 0x2000, scoped, tag = 'output window, operand 0']
    %9 = vsyncpa [#allocation3], 0
    %s10 = scalar_lea.sflag [#allocation3], 1
    %11 = vsyncpa %s10, 0
    %12 = vsyncpa [#allocation6], 0
    %s13 = scalar_lea.sflag [#allocation6], 1
    %14 = vsyncpa %s13, 0
    %15 = vsyncpa [#allocation9], 0
    %s16 = scalar_lea.sflag [#allocation9], 1
    %17 = vsyncpa %s16, 0
    %18 = vsyncpa [#allocation4], 0
    %s19 = scalar_lea.sflag [#allocation4], 1
    %20 = vsyncpa %s19, 0
    loop: start=0, step=1, limit=4
    $region2: #{tpu_custom_call.1} parent=1 // loop_pre_header
      _
    $region3: #{tpu_custom_call.1} parent=1 // loop_header
      %s22 = sphi 0, %s26
      %p23 = scmp.ge.s32.totalorder %s22, 4
      %s29 = sphi 0, %s48
      %s30 = sphi 0, %s44
      %s31 = sphi 0, %s40
      %s32 = sphi 0, %s29
      %s33 = sphi 0, %s30
      %s34 = sphi 0, %s31
      %s35 = sphi 0, %s32
      %s36 = sphi 0, %s33
      %s37 = sphi 0, %s34
      %s55 = sphi 0, %s57
      %s58 = sphi 0, %s55
      %s59 = sphi 0, %s58
      %s75 = sphi 0, %s59
      %s83 = sphi 0, %s85
      %s86 = sphi 0, %s83
      %s87 = sphi 0, %s86
      %s103 = sphi 0, %s87
      %s111 = sphi 0, %s113
      %s114 = sphi 0, %s111
      %s115 = sphi 0, %s114
      %s131 = sphi 0, %s115
      %s139 = sphi 0, %s141
      %s142 = sphi 0, %s139
      %s143 = sphi 0, %s142
      %s159 = sphi 0, %s143
      %s169 = sphi 0, %s171
      %s172 = sphi 0, %s169
      %s173 = sphi 0, %s172
      %s189 = sphi 0, %s173
    $region4: #{tpu_custom_call.1} parent=1 // loop_header_branch
      %25 = sbr.rel (%p23) target = $region8
    $region5: #{tpu_custom_call.1} parent=1 // loop_body
      %s27 = ssub.s32 %s22, 1
      %s28 = ssub.s32 %s22, 2
      %s38 = sadd.s32 1, %s31
      %p39 = scmp.ge.s32.totalorder %s38, 1
      %s40 = scalar_select %p39, 0, %s38
      %s41 = sadd.s32 1, %s30
      %s42 = scalar_select %p39, %s41, %s30
      %p43 = scmp.ge.s32.totalorder %s42, 1
      %s44 = scalar_select %p43, 0, %s42
      %s45 = sadd.s32 1, %s29
      %s46 = scalar_select %p43, %s45, %s29
      %p47 = scmp.ge.s32.totalorder %s46, 2
      %s48 = scalar_select %p47, 0, %s46
      %s49 = ssub.s32 %s29, %s48
      %s50 = ssub.s32 %s31, %s40
      %s51 = sor.u32 %s49, %s50
      %s52 = ssub.s32 %s30, %s44
      %s53 = sor.u32 %s51, %s52
      %p54 = scmp.eq.s32.totalorder %s53, 0
      %s56 = sadd.s32 %s55, 1
      %s57 = scalar_select %p54, %s55, %s56
      %p60 = pneg %p54
      %p61 = scmp.eq.s32.totalorder %s22, 1
      %p62 = por %p60, %p61
      %p63 = scmp.ne.s32.totalorder %s55, %s58
      %p64 = scmp.eq.s32.totalorder %s22, 0
      %p65 = por %p63, %p64
      %p66 = scmp.ne.s32.totalorder %s55, %s58
      %p67 = scmp.eq.s32.totalorder %s27, 1
      %p68 = por %p66, %p67
      %p69 = scmp.ne.s32.totalorder %s58, %s59
      %p70 = scmp.eq.s32.totalorder %s27, 0
      %p71 = por %p69, %p70
      %p72 = scmp.ne.s32.totalorder %s58, %s59
      %p73 = scmp.eq.s32.totalorder %s28, 1
      %p74 = por %p72, %p73
      %p76 = scmp.ne.s32.totalorder %s59, %s75
      %p77 = scmp.eq.s32.totalorder %s28, 0
      %p78 = por %p76, %p77
      %s79 = ssub.s32 %s29, %s48
      %s80 = ssub.s32 %s30, %s44
      %s81 = sor.u32 %s79, %s80
      %p82 = scmp.eq.s32.totalorder %s81, 0
      %s84 = sadd.s32 %s83, 1
      %s85 = scalar_select %p82, %s83, %s84
      %p88 = pneg %p82
      %p89 = scmp.eq.s32.totalorder %s22, 1
      %p90 = por %p88, %p89
      %p91 = scmp.ne.s32.totalorder %s83, %s86
      %p92 = scmp.eq.s32.totalorder %s22, 0
      %p93 = por %p91, %p92
      %p94 = scmp.ne.s32.totalorder %s83, %s86
      %p95 = scmp.eq.s32.totalorder %s27, 1
      %p96 = por %p94, %p95
      %p97 = scmp.ne.s32.totalorder %s86, %s87
      %p98 = scmp.eq.s32.totalorder %s27, 0
      %p99 = por %p97, %p98
      %p100 = scmp.ne.s32.totalorder %s86, %s87
      %p101 = scmp.eq.s32.totalorder %s28, 1
      %p102 = por %p100, %p101
      %p104 = scmp.ne.s32.totalorder %s87, %s103
      %p105 = scmp.eq.s32.totalorder %s28, 0
      %p106 = por %p104, %p105
      %s107 = ssub.s32 %s29, %s48
      %s108 = ssub.s32 %s30, %s44
      %s109 = sor.u32 %s107, %s108
      %p110 = scmp.eq.s32.totalorder %s109, 0
      %s112 = sadd.s32 %s111, 1
      %s113 = scalar_select %p110, %s111, %s112
      %p116 = pneg %p110
      %p117 = scmp.eq.s32.totalorder %s22, 1
      %p118 = por %p116, %p117
      %p119 = scmp.ne.s32.totalorder %s111, %s114
      %p120 = scmp.eq.s32.totalorder %s22, 0
      %p121 = por %p119, %p120
      %p122 = scmp.ne.s32.totalorder %s111, %s114
      %p123 = scmp.eq.s32.totalorder %s27, 1
      %p124 = por %p122, %p123
      %p125 = scmp.ne.s32.totalorder %s114, %s115
      %p126 = scmp.eq.s32.totalorder %s27, 0
      %p127 = por %p125, %p126
      %p128 = scmp.ne.s32.totalorder %s114, %s115
      %p129 = scmp.eq.s32.totalorder %s28, 1
      %p130 = por %p128, %p129
      %p132 = scmp.ne.s32.totalorder %s115, %s131
      %p133 = scmp.eq.s32.totalorder %s28, 0
      %p134 = por %p132, %p133
      %s135 = ssub.s32 %s29, %s48
      %s136 = ssub.s32 %s31, %s40
      %s137 = sor.u32 %s135, %s136
      %p138 = scmp.eq.s32.totalorder %s137, 0
      %s140 = sadd.s32 %s139, 1
      %s141 = scalar_select %p138, %s139, %s140
      %p144 = pneg %p138
      %p145 = scmp.eq.s32.totalorder %s22, 1
      %p146 = por %p144, %p145
      %p147 = scmp.ne.s32.totalorder %s139, %s142
      %p148 = scmp.eq.s32.totalorder %s22, 0
      %p149 = por %p147, %p148
      %p150 = scmp.ne.s32.totalorder %s139, %s142
      %p151 = scmp.eq.s32.totalorder %s27, 1
      %p152 = por %p150, %p151
      %p153 = scmp.ne.s32.totalorder %s142, %s143
      %p154 = scmp.eq.s32.totalorder %s27, 0
      %p155 = por %p153, %p154
      %p156 = scmp.ne.s32.totalorder %s142, %s143
      %p157 = scmp.eq.s32.totalorder %s28, 1
      %p158 = por %p156, %p157
      %p160 = scmp.ne.s32.totalorder %s143, %s159
      %p161 = scmp.eq.s32.totalorder %s28, 0
      %p162 = por %p160, %p161
      %s163 = ssub.s32 %s29, %s48
      %s164 = ssub.s32 %s31, %s40
      %s165 = sor.u32 %s163, %s164
      %s166 = ssub.s32 %s30, %s44
      %s167 = sor.u32 %s165, %s166
      %p168 = scmp.eq.s32.totalorder %s167, 0
      %s170 = sadd.s32 %s169, 1
      %s171 = scalar_select %p168, %s169, %s170
      %p174 = pneg %p168
      %p175 = scmp.eq.s32.totalorder %s22, 1
      %p176 = por %p174, %p175
      %p177 = scmp.ne.s32.totalorder %s169, %s172
      %p178 = scmp.eq.s32.totalorder %s22, 0
      %p179 = por %p177, %p178
      %p180 = scmp.ne.s32.totalorder %s169, %s172
      %p181 = scmp.eq.s32.totalorder %s27, 1
      %p182 = por %p180, %p181
      %p183 = scmp.ne.s32.totalorder %s172, %s173
      %p184 = scmp.eq.s32.totalorder %s27, 0
      %p185 = por %p183, %p184
      %p186 = scmp.ne.s32.totalorder %s172, %s173
      %p187 = scmp.eq.s32.totalorder %s28, 1
      %p188 = por %p186, %p187
      %p190 = scmp.ne.s32.totalorder %s173, %s189
      %p191 = scmp.eq.s32.totalorder %s28, 0
      %p192 = por %p190, %p191
      %p193 = scmp.le.s32.totalorder 1, %s22
      %p194 = scmp.lt.s32.totalorder %s22, 3
      %p195 = pnand %p193, %p194
      %p196 = pneg %p195
      // Predicated region
      $region9: #{tpu_custom_call.1} parent=5 // pred_check
        _
      $region10: #{tpu_custom_call.1} parent=5 // pred_check_branch
        %198 = sbr.rel (%p195) target = $region12
      $region11: #{tpu_custom_call.1} parent=5 // pred_region
        %s199 = ssub.s32 %s22, 1
      $region12: #{tpu_custom_call.1} parent=5 // pred_fallthru
        _
      %p200 = scmp.lt.s32.totalorder %s22, 2
      // Predicated region
      $region13: #{tpu_custom_call.1} parent=5 // pred_check
        %p201 = pneg %p200
      $region14: #{tpu_custom_call.1} parent=5 // pred_check_branch
        %203 = sbr.rel (%p201) target = $region16
      $region15: #{tpu_custom_call.1} parent=5 // pred_region
        // Predicated region
        $region17: #{tpu_custom_call.1} parent=15 // pred_check
          %p204 = pneg %p65
        $region18: #{tpu_custom_call.1} parent=15 // pred_check_branch
          %206 = sbr.rel (%p204) target = $region20
        $region19: #{tpu_custom_call.1} parent=15 // pred_region
          %s207 = sand.u32 %s55, 1
          %s208 = scalar_lea.sflag [#allocation3], %s207
          %s209 = sand.u32 %s55, 1
          %s210 = smul.addr %s209, 8
          %s211 = scalar_lea.vmem [#allocation2], %s210
          %213 = vsyncadd %s208, 0
          %s214 = sadd.s32 %s30, %s31
          %s215 = sadd.s32 %s214, %s29
          %s216 = smul.addr %s215, 8
          %s217 = scalar_lea.hbm %s0, %s216
          %s219 = sshll.u32 %s217, 4
          %s220 = int_to_ptr.hbm [resolvable:$true] %s219
          %s221 = sshll.u32 %s211, 4
          %s222 = int_to_ptr.vmem [resolvable:$true] %s221
          %224 = dma.hbm_to_vmem [thread:$0]  %s220, 128, %s222, %s208
        $region20: #{tpu_custom_call.1} parent=15 // pred_fallthru
          _
        // Predicated region
        $region21: #{tpu_custom_call.1} parent=15 // pred_check
          %p225 = pneg %p93
        $region22: #{tpu_custom_call.1} parent=15 // pred_check_branch
          %227 = sbr.rel (%p225) target = $region24
        $region23: #{tpu_custom_call.1} parent=15 // pred_region
          %s228 = sand.u32 %s22, 1
          %s229 = scalar_lea.sflag [#allocation6], %s228
          %s230 = sand.u32 %s83, 1
          %s231 = smul.addr %s230, 8
          %s232 = scalar_lea.vmem [#allocation5], %s231
          %234 = vsyncadd %s229, 0
          %s235 = sadd.s32 %s30, %s29
          %s236 = smul.addr %s235, 8
          %s237 = scalar_lea.hbm %s1, %s236
          %s239 = sshll.u32 %s237, 4
          %s240 = int_to_ptr.hbm [resolvable:$true] %s239
          %s241 = sshll.u32 %s232, 4
          %s242 = int_to_ptr.vmem [resolvable:$true] %s241
          %244 = dma.hbm_to_vmem [thread:$0]  %s240, 128, %s242, %s229
        $region24: #{tpu_custom_call.1} parent=15 // pred_fallthru
          _
        // Predicated region
        $region25: #{tpu_custom_call.1} parent=15 // pred_check
          %p245 = pneg %p121
        $region26: #{tpu_custom_call.1} parent=15 // pred_check_branch
          %247 = sbr.rel (%p245) target = $region28
        $region27: #{tpu_custom_call.1} parent=15 // pred_region
          %s248 = sand.u32 %s22, 1
          %s249 = scalar_lea.sflag [#allocation6], %s248
          %s250 = sand.u32 %s111, 1
          %s251 = smul.addr %s250, 8
          %s252 = scalar_lea.vmem [#allocation7], %s251
          %254 = vsyncadd %s249, 0
          %s255 = sadd.s32 %s30, %s29
          %s256 = smul.addr %s255, 8
          %s257 = scalar_lea.hbm %s2, %s256
          %s259 = sshll.u32 %s257, 4
          %s260 = int_to_ptr.hbm [resolvable:$true] %s259
          %s261 = sshll.u32 %s252, 4
          %s262 = int_to_ptr.vmem [resolvable:$true] %s261
          %264 = dma.hbm_to_vmem [thread:$0]  %s260, 128, %s262, %s249
        $region28: #{tpu_custom_call.1} parent=15 // pred_fallthru
          _
        // Predicated region
        $region29: #{tpu_custom_call.1} parent=15 // pred_check
          %p265 = pneg %p149
        $region30: #{tpu_custom_call.1} parent=15 // pred_check_branch
          %267 = sbr.rel (%p265) target = $region32
        $region31: #{tpu_custom_call.1} parent=15 // pred_region
          %s268 = sand.u32 %s139, 1
          %s269 = scalar_lea.sflag [#allocation9], %s268
          %s270 = sand.u32 %s139, 1
          %s271 = smul.addr %s270, 2
          %s272 = scalar_lea.vmem [#allocation8], %s271
          %274 = vsyncadd %s269, 0
          %s275 = sadd.s32 %s31, %s29
          %s276 = smul.addr %s275, 2
          %s277 = scalar_lea.hbm %s3, %s276
          %s279 = sshll.u32 %s277, 4
          %s280 = int_to_ptr.hbm [resolvable:$true] %s279
          %s281 = sshll.u32 %s272, 4
          %s282 = int_to_ptr.vmem [resolvable:$true] %s281
          %284 = dma.hbm_to_vmem [thread:$0]  %s280, 32, %s282, %s269
        $region32: #{tpu_custom_call.1} parent=15 // pred_fallthru
          _
      $region16: #{tpu_custom_call.1} parent=5 // pred_fallthru
        _
      %p285 = scmp.le.s32.totalorder 1, %s22
      %p286 = scmp.lt.s32.totalorder %s22, 3
      %p287 = pnand %p285, %p286
      %p288 = pneg %p287
      // Predicated region
      $region33: #{tpu_custom_call.1} parent=5 // pred_check
        _
      $region34: #{tpu_custom_call.1} parent=5 // pred_check_branch
        %290 = sbr.rel (%p287) target = $region36
      $region35: #{tpu_custom_call.1} parent=5 // pred_region
        %s291 = ssub.s32 %s22, 1
        %s292 = sand.u32 %s58, 1
        %s293 = scalar_lea.sflag [#allocation3], %s292
        %s294 = sand.u32 %s58, 1
        %s295 = smul.addr %s294, 8
        %s296 = scalar_lea.vmem [#allocation2], %s295
        // Predicated region
        $region37: #{tpu_custom_call.1} parent=35 // pred_check
          %p297 = pneg %p71
        $region38: #{tpu_custom_call.1} parent=35 // pred_check_branch
          %299 = sbr.rel (%p297) target = $region40
        $region39: #{tpu_custom_call.1} parent=35 // pred_region
          %301 = dma.done %s293, 128
        $region40: #{tpu_custom_call.1} parent=35 // pred_fallthru
          _
        %s302 = sand.u32 %s27, 1
        %s303 = scalar_lea.sflag [#allocation6], %s302
        %s304 = sand.u32 %s86, 1
        %s305 = smul.addr %s304, 8
        %s306 = scalar_lea.vmem [#allocation5], %s305
        // Predicated region
        $region41: #{tpu_custom_call.1} parent=35 // pred_check
          %p307 = pneg %p99
        $region42: #{tpu_custom_call.1} parent=35 // pred_check_branch
          %309 = sbr.rel (%p307) target = $region44
        $region43: #{tpu_custom_call.1} parent=35 // pred_region
          %311 = dma.done %s303, 128
        $region44: #{tpu_custom_call.1} parent=35 // pred_fallthru
          _
        %s312 = sand.u32 %s27, 1
        %s313 = scalar_lea.sflag [#allocation6], %s312
        %s314 = sand.u32 %s114, 1
        %s315 = smul.addr %s314, 8
        %s316 = scalar_lea.vmem [#allocation7], %s315
        // Predicated region
        $region45: #{tpu_custom_call.1} parent=35 // pred_check
          %p317 = pneg %p127
        $region46: #{tpu_custom_call.1} parent=35 // pred_check_branch
          %319 = sbr.rel (%p317) target = $region48
        $region47: #{tpu_custom_call.1} parent=35 // pred_region
          %321 = dma.done %s313, 128
        $region48: #{tpu_custom_call.1} parent=35 // pred_fallthru
          _
        %s322 = sand.u32 %s142, 1
        %s323 = scalar_lea.sflag [#allocation9], %s322
        %s324 = sand.u32 %s142, 1
        %s325 = smul.addr %s324, 2
        %s326 = scalar_lea.vmem [#allocation8], %s325
        // Predicated region
        $region49: #{tpu_custom_call.1} parent=35 // pred_check
          %p327 = pneg %p155
        $region50: #{tpu_custom_call.1} parent=35 // pred_check_branch
          %329 = sbr.rel (%p327) target = $region52
        $region51: #{tpu_custom_call.1} parent=35 // pred_region
          %331 = dma.done %s323, 32
        $region52: #{tpu_custom_call.1} parent=35 // pred_fallthru
          _
        %s332 = sand.u32 %s58, 1
        %s333 = scalar_lea.sflag [#allocation3], %s332
        %s334 = sand.u32 %s58, 1
        %s335 = smul.addr %s334, 8
        %s336 = scalar_lea.vmem [#allocation2], %s335
        %p337 = pneg %p71
        %p338 = pneg %p68
        %s339 = sand.u32 %s27, 1
        %s340 = scalar_lea.sflag [#allocation6], %s339
        %s341 = sand.u32 %s86, 1
        %s342 = smul.addr %s341, 8
        %s343 = scalar_lea.vmem [#allocation5], %s342
        %p344 = pneg %p99
        %p345 = pneg %p96
        %s346 = sand.u32 %s27, 1
        %s347 = scalar_lea.sflag [#allocation6], %s346
        %s348 = sand.u32 %s114, 1
        %s349 = smul.addr %s348, 8
        %s350 = scalar_lea.vmem [#allocation7], %s349
        %p351 = pneg %p127
        %p352 = pneg %p124
        %s353 = sand.u32 %s142, 1
        %s354 = scalar_lea.sflag [#allocation9], %s353
        %s355 = sand.u32 %s142, 1
        %s356 = smul.addr %s355, 2
        %s357 = scalar_lea.vmem [#allocation8], %s356
        %p358 = pneg %p155
        %p359 = pneg %p152
        %p360 = pneg %p185
        %p361 = pneg %p182
        %s362 = sand.u32 %s172, 1
        %s363 = scalar_lea.sflag [#allocation4], %s362
        %s364 = sand.u32 %s172, 1
        %s365 = smul.addr %s364, 8
        %s366 = scalar_lea.vmem [#allocation10], %s365
        %v367 = vld [vmem:[%s296] sm:$0xff]
        %v368 = vmul.f32 %v367, 0.35355338
        %v369 = vld [vmem:[%s306] sm:$0xff]
        %v370 = vld [vmem:[%s316] sm:$0xff]
        %v371 = vld [vmem:[%s326] sm:$0x3]
        %v372 = vunpack.c.0.s8 %v371
        %v373 = vcvt.s32.f32 %v372
        %v374 = vmul.f32 %v373, -10000.0
        %vm375 = vcmask 64512
        %v377 = vsel %vm375, %v368, 0
        %v380 = vsel %vm375, %v369, 0
        %382 = vmatpush.xpose.msra.mxu0 0.0
        %383 = vmatpush.xpose.msra.mxu0 0.0
        %384 = vmatpush.xpose.msra.mxu0 0.0
        %385 = vmatpush.xpose.msra.mxu0 0.0
        %386 = vmatpush.xpose.msra.mxu0 0.0
        %387 = vmatpush.xpose.msra.mxu0 0.0
        %388 = vmatpush.xpose.msra.mxu0 0.0
        %389 = vmatpush.xpose.msra.mxu0 0.0
        %390 = vmatpush.xpose.msra.mxu0 0.0
        %391 = vmatpush.xpose.msra.mxu0 0.0
        %392 = vmatpush.xpose.msra.mxu0 0.0
        %393 = vmatpush.xpose.msra.mxu0 0.0
        %394 = vmatpush.xpose.msra.mxu0 0.0
        %395 = vmatpush.xpose.msra.mxu0 0.0
        %396 = vmatpush.xpose.msra.mxu0 0.0
        %397 = vmatpush.xpose.msra.mxu0 %v380
        %398 = vmatmul.f32.gmra.mxu0 %v377
        %v399 = vpop.f32.mrf.mxu0
        %v400 = vadd.f32 %v374, %v399
        %401 = vdwg.mxu0
        %v402 = vsel %vm375, %v400, -inf
        %403 = vmax.xlane.f32.xlu0 %v402
        %v404 = vpop.xlane.xlu0 %403
        %v405 = vsub.f32 %v400, %v404
        %v406 = vmul.f32 %v405, 1.442695
        %v407 = vpow.pop %v406
        %v408 = vsel %vm375, %v407, 0.0
        %409 = vadd.xlane.f32.xlu0 %v408
        %v410 = vpop.xlane.xlu0 %409
        %v412 = vsel %vm375, %v407, 0
        %414 = vmatpush.msra.mxu0 0.0
        %415 = vmatpush.msra.mxu0 0.0
        %416 = vmatpush.msra.mxu0 0.0
        %417 = vmatpush.msra.mxu0 0.0
        %418 = vmatpush.msra.mxu0 0.0
        %419 = vmatpush.msra.mxu0 0.0
        %420 = vmatpush.msra.mxu0 0.0
        %421 = vmatpush.msra.mxu0 0.0
        %422 = vmatpush.msra.mxu0 0.0
        %423 = vmatpush.msra.mxu0 0.0
        %424 = vmatpush.msra.mxu0 0.0
        %425 = vmatpush.msra.mxu0 0.0
        %426 = vmatpush.msra.mxu0 0.0
        %427 = vmatpush.msra.mxu0 0.0
        %428 = vmatpush.msra.mxu0 0.0
        %429 = vmatpush.msra.mxu0 %v370
        %430 = vmatmul.f32.gmra.mxu0 %v412
        %v431 = vpop.f32.mrf.mxu0
        %v432 = vadd.f32 0.0, %v431
        %433 = vdwg.mxu0
        %v434 = vrcp.pop %v410
        %v435 = vmul.f32 %v410, %v434
        %v436 = vsub.f32 1.0, %v435
        %v437 = vmul.f32 %v434, %v436
        %v438 = vadd.f32 %v434, %v437
        %vm439 = vweird.f32 %v410
        %vm440 = vweird.f32 %v434
        %vm441 = vmor %vm439, %vm440
        %v442 = vsel %vm441, %v434, %v438
        %v443 = vand.u32 2147483647, %v410
        %vm444 = vcmp.eq.f32.partialorder %v443, 8.507059e+37
        %v445 = vand.u32 %v410, 2147483648
        %v446 = vor.u32 1.1754944e-38, %v445
        %v447 = vsel %vm444, %v446, %v442
        %v448 = vmul.f32 %v432, %v447
        %449 = vrot.lane.b32.xlu0 %v368, 120
        %v450 = vpop.permute.xlu0 %449
        %451 = vrot.lane.b32.xlu0 %v369, 120
        %v452 = vpop.permute.xlu0 %451
        %v453 = vsel %vm375, %v450, 0
        %v455 = vsel %vm375, %v452, 0
        %457 = vmatpush.xpose.msra.mxu0 0.0
        %458 = vmatpush.xpose.msra.mxu0 0.0
        %459 = vmatpush.xpose.msra.mxu0 0.0
        %460 = vmatpush.xpose.msra.mxu0 0.0
        %461 = vmatpush.xpose.msra.mxu0 0.0
        %462 = vmatpush.xpose.msra.mxu0 0.0
        %463 = vmatpush.xpose.msra.mxu0 0.0
        %464 = vmatpush.xpose.msra.mxu0 0.0
        %465 = vmatpush.xpose.msra.mxu0 0.0
        %466 = vmatpush.xpose.msra.mxu0 0.0
        %467 = vmatpush.xpose.msra.mxu0 0.0
        %468 = vmatpush.xpose.msra.mxu0 0.0
        %469 = vmatpush.xpose.msra.mxu0 0.0
        %470 = vmatpush.xpose.msra.mxu0 0.0
        %471 = vmatpush.xpose.msra.mxu0 0.0
        %472 = vmatpush.xpose.msra.mxu0 %v455
        %473 = vmatmul.f32.gmra.mxu0 %v453
        %v474 = vpop.f32.mrf.mxu0
        %v475 = vadd.f32 %v374, %v474
        %476 = vdwg.mxu0
        %v477 = vsel %vm375, %v475, -inf
        %478 = vmax.xlane.f32.xlu0 %v477
        %v479 = vpop.xlane.xlu0 %478
        %v480 = vsub.f32 %v475, %v479
        %v481 = vmul.f32 %v480, 1.442695
        %v482 = vpow.pop %v481
        %v483 = vsel %vm375, %v482, 0.0
        %484 = vadd.xlane.f32.xlu0 %v483
        %v485 = vpop.xlane.xlu0 %484
        %487 = vrot.lane.b32.xlu0 %v370, 120
        %v488 = vpop.permute.xlu0 %487
        %v491 = vsel %vm375, %v482, 0
        %493 = vmatpush.msra.mxu0 0.0
        %494 = vmatpush.msra.mxu0 0.0
        %495 = vmatpush.msra.mxu0 0.0
        %496 = vmatpush.msra.mxu0 0.0
        %497 = vmatpush.msra.mxu0 0.0
        %498 = vmatpush.msra.mxu0 0.0
        %499 = vmatpush.msra.mxu0 0.0
        %500 = vmatpush.msra.mxu0 0.0
        %501 = vmatpush.msra.mxu0 0.0
        %502 = vmatpush.msra.mxu0 0.0
        %503 = vmatpush.msra.mxu0 0.0
        %504 = vmatpush.msra.mxu0 0.0
        %505 = vmatpush.msra.mxu0 0.0
        %506 = vmatpush.msra.mxu0 0.0
        %507 = vmatpush.msra.mxu0 0.0
        %508 = vmatpush.msra.mxu0 %v488
        %509 = vmatmul.f32.gmra.mxu0 %v491
        %v510 = vpop.f32.mrf.mxu0
        %v511 = vadd.f32 0.0, %v510
        %512 = vdwg.mxu0
        %v513 = vrcp.pop %v485
        %v514 = vmul.f32 %v485, %v513
        %v515 = vsub.f32 1.0, %v514
        %v516 = vmul.f32 %v513, %v515
        %v517 = vadd.f32 %v513, %v516
        %vm518 = vweird.f32 %v485
        %vm519 = vweird.f32 %v513
        %vm520 = vmor %vm518, %vm519
        %v521 = vsel %vm520, %v513, %v517
        %v522 = vand.u32 2147483647, %v485
        %vm523 = vcmp.eq.f32.partialorder %v522, 8.507059e+37
        %v524 = vand.u32 %v485, 2147483648
        %v525 = vor.u32 1.1754944e-38, %v524
        %v526 = vsel %vm523, %v525, %v521
        %v527 = vmul.f32 %v511, %v526
        %528 = vrot.lane.b32.xlu0 %v368, 112
        %v529 = vpop.permute.xlu0 %528
        %530 = vrot.lane.b32.xlu0 %v369, 112
        %v531 = vpop.permute.xlu0 %530
        %v532 = vsel %vm375, %v529, 0
        %v534 = vsel %vm375, %v531, 0
        %536 = vmatpush.xpose.msra.mxu0 0.0
        %537 = vmatpush.xpose.msra.mxu0 0.0
        %538 = vmatpush.xpose.msra.mxu0 0.0
        %539 = vmatpush.xpose.msra.mxu0 0.0
        %540 = vmatpush.xpose.msra.mxu0 0.0
        %541 = vmatpush.xpose.msra.mxu0 0.0
        %542 = vmatpush.xpose.msra.mxu0 0.0
        %543 = vmatpush.xpose.msra.mxu0 0.0
        %544 = vmatpush.xpose.msra.mxu0 0.0
        %545 = vmatpush.xpose.msra.mxu0 0.0
        %546 = vmatpush.xpose.msra.mxu0 0.0
        %547 = vmatpush.xpose.msra.mxu0 0.0
        %548 = vmatpush.xpose.msra.mxu0 0.0
        %549 = vmatpush.xpose.msra.mxu0 0.0
        %550 = vmatpush.xpose.msra.mxu0 0.0
        %551 = vmatpush.xpose.msra.mxu0 %v534
        %552 = vmatmul.f32.gmra.mxu0 %v532
        %v553 = vpop.f32.mrf.mxu0
        %v554 = vadd.f32 %v374, %v553
        %555 = vdwg.mxu0
        %v556 = vsel %vm375, %v554, -inf
        %557 = vmax.xlane.f32.xlu0 %v556
        %v558 = vpop.xlane.xlu0 %557
        %v559 = vsub.f32 %v554, %v558
        %v560 = vmul.f32 %v559, 1.442695
        %v561 = vpow.pop %v560
        %v562 = vsel %vm375, %v561, 0.0
        %563 = vadd.xlane.f32.xlu0 %v562
        %v564 = vpop.xlane.xlu0 %563
        %565 = vrot.lane.b32.xlu0 %v370, 112
        %v566 = vpop.permute.xlu0 %565
        %v569 = vsel %vm375, %v561, 0
        %571 = vmatpush.msra.mxu0 0.0
        %572 = vmatpush.msra.mxu0 0.0
        %573 = vmatpush.msra.mxu0 0.0
        %574 = vmatpush.msra.mxu0 0.0
        %575 = vmatpush.msra.mxu0 0.0
        %576 = vmatpush.msra.mxu0 0.0
        %577 = vmatpush.msra.mxu0 0.0
        %578 = vmatpush.msra.mxu0 0.0
        %579 = vmatpush.msra.mxu0 0.0
        %580 = vmatpush.msra.mxu0 0.0
        %581 = vmatpush.msra.mxu0 0.0
        %582 = vmatpush.msra.mxu0 0.0
        %583 = vmatpush.msra.mxu0 0.0
        %584 = vmatpush.msra.mxu0 0.0
        %585 = vmatpush.msra.mxu0 0.0
        %586 = vmatpush.msra.mxu0 %v566
        %587 = vmatmul.f32.gmra.mxu0 %v569
        %v588 = vpop.f32.mrf.mxu0
        %v589 = vadd.f32 0.0, %v588
        %590 = vdwg.mxu0
        %v591 = vrcp.pop %v564
        %v592 = vmul.f32 %v564, %v591
        %v593 = vsub.f32 1.0, %v592
        %v594 = vmul.f32 %v591, %v593
        %v595 = vadd.f32 %v591, %v594
        %vm596 = vweird.f32 %v564
        %vm597 = vweird.f32 %v591
        %vm598 = vmor %vm596, %vm597
        %v599 = vsel %vm598, %v591, %v595
        %v600 = vand.u32 2147483647, %v564
        %vm601 = vcmp.eq.f32.partialorder %v600, 8.507059e+37
        %v602 = vand.u32 %v564, 2147483648
        %v603 = vor.u32 1.1754944e-38, %v602
        %v604 = vsel %vm601, %v603, %v599
        %v605 = vmul.f32 %v589, %v604
        %606 = vrot.lane.b32.xlu0 %v368, 104
        %v607 = vpop.permute.xlu0 %606
        %608 = vrot.lane.b32.xlu0 %v369, 104
        %v609 = vpop.permute.xlu0 %608
        %v610 = vsel %vm375, %v607, 0
        %v612 = vsel %vm375, %v609, 0
        %614 = vmatpush.xpose.msra.mxu0 0.0
        %615 = vmatpush.xpose.msra.mxu0 0.0
        %616 = vmatpush.xpose.msra.mxu0 0.0
        %617 = vmatpush.xpose.msra.mxu0 0.0
        %618 = vmatpush.xpose.msra.mxu0 0.0
        %619 = vmatpush.xpose.msra.mxu0 0.0
        %620 = vmatpush.xpose.msra.mxu0 0.0
        %621 = vmatpush.xpose.msra.mxu0 0.0
        %622 = vmatpush.xpose.msra.mxu0 0.0
        %623 = vmatpush.xpose.msra.mxu0 0.0
        %624 = vmatpush.xpose.msra.mxu0 0.0
        %625 = vmatpush.xpose.msra.mxu0 0.0
        %626 = vmatpush.xpose.msra.mxu0 0.0
        %627 = vmatpush.xpose.msra.mxu0 0.0
        %628 = vmatpush.xpose.msra.mxu0 0.0
        %629 = vmatpush.xpose.msra.mxu0 %v612
        %630 = vmatmul.f32.gmra.mxu0 %v610
        %v631 = vpop.f32.mrf.mxu0
        %v632 = vadd.f32 %v374, %v631
        %633 = vdwg.mxu0
        %v634 = vsel %vm375, %v632, -inf
        %635 = vmax.xlane.f32.xlu0 %v634
        %v636 = vpop.xlane.xlu0 %635
        %v637 = vsub.f32 %v632, %v636
        %v638 = vmul.f32 %v637, 1.442695
        %v639 = vpow.pop %v638
        %v640 = vsel %vm375, %v639, 0.0
        %641 = vadd.xlane.f32.xlu0 %v640
        %v642 = vpop.xlane.xlu0 %641
        %643 = vrot.lane.b32.xlu0 %v370, 104
        %v644 = vpop.permute.xlu0 %643
        %v647 = vsel %vm375, %v639, 0
        %649 = vmatpush.msra.mxu0 0.0
        %650 = vmatpush.msra.mxu0 0.0
        %651 = vmatpush.msra.mxu0 0.0
        %652 = vmatpush.msra.mxu0 0.0
        %653 = vmatpush.msra.mxu0 0.0
        %654 = vmatpush.msra.mxu0 0.0
        %655 = vmatpush.msra.mxu0 0.0
        %656 = vmatpush.msra.mxu0 0.0
        %657 = vmatpush.msra.mxu0 0.0
        %658 = vmatpush.msra.mxu0 0.0
        %659 = vmatpush.msra.mxu0 0.0
        %660 = vmatpush.msra.mxu0 0.0
        %661 = vmatpush.msra.mxu0 0.0
        %662 = vmatpush.msra.mxu0 0.0
        %663 = vmatpush.msra.mxu0 0.0
        %664 = vmatpush.msra.mxu0 %v644
        %665 = vmatmul.f32.gmra.mxu0 %v647
        %v666 = vpop.f32.mrf.mxu0
        %v667 = vadd.f32 0.0, %v666
        %668 = vdwg.mxu0
        %v669 = vrcp.pop %v642
        %v670 = vmul.f32 %v642, %v669
        %v671 = vsub.f32 1.0, %v670
        %v672 = vmul.f32 %v669, %v671
        %v673 = vadd.f32 %v669, %v672
        %vm674 = vweird.f32 %v642
        %vm675 = vweird.f32 %v669
        %vm676 = vmor %vm674, %vm675
        %v677 = vsel %vm676, %v669, %v673
        %v678 = vand.u32 2147483647, %v642
        %vm679 = vcmp.eq.f32.partialorder %v678, 8.507059e+37
        %v680 = vand.u32 %v642, 2147483648
        %v681 = vor.u32 1.1754944e-38, %v680
        %v682 = vsel %vm679, %v681, %v677
        %v683 = vmul.f32 %v667, %v682
        %685 = vrot.lane.b32.xlu0 %v527, 8
        %v686 = vpop.permute.xlu0 %685
        %689 = vrot.lane.b32.xlu0 %v605, 16
        %v690 = vpop.permute.xlu0 %689
        %693 = vrot.lane.b32.xlu0 %v683, 24
        %v694 = vpop.permute.xlu0 %693
        %v696 = vsel %vm375, %v448, %v686
        %vm697 = vcmask 130048
        %v698 = vsel %vm697, %v696, %v690
        %vm699 = vcmask 195584
        %v700 = vsel %vm699, %v698, %v694
        %vm701 = vcmask 261120
        %702 = vst.msk [vmem:[%s366] sm:$0xff] %vm701, %v700
        %s703 = sand.u32 %s172, 1
        %s704 = scalar_lea.sflag [#allocation4], %s703
        %s705 = sand.u32 %s172, 1
        %s706 = smul.addr %s705, 8
        %s707 = scalar_lea.vmem [#allocation10], %s706
        // Predicated region
        $region53: #{tpu_custom_call.1} parent=35 // pred_check
          %p708 = pneg %p182
        $region54: #{tpu_custom_call.1} parent=35 // pred_check_branch
          %710 = sbr.rel (%p708) target = $region56
        $region55: #{tpu_custom_call.1} parent=35 // pred_region
          %712 = vsyncadd %s704, 0
          %s713 = sadd.s32 %s33, %s34
          %s714 = sadd.s32 %s713, %s32
          %s715 = smul.addr %s714, 8
          %s716 = scalar_lea.hbm %s4, %s715
          %s718 = sshll.u32 %s707, 4
          %s719 = int_to_ptr.vmem [resolvable:$true] %s718
          %s720 = sshll.u32 %s716, 4
          %s721 = int_to_ptr.hbm [resolvable:$true] %s720
          %723 = dma.vmem_to_hbm [thread:$0]  %s719, 128, %s721, %s704
        $region56: #{tpu_custom_call.1} parent=35 // pred_fallthru
          _
      $region36: #{tpu_custom_call.1} parent=5 // pred_fallthru
        _
      %p724 = scmp.le.s32.totalorder 2, %s22
      // Predicated region
      $region57: #{tpu_custom_call.1} parent=5 // pred_check
        %p725 = pneg %p724
      $region58: #{tpu_custom_call.1} parent=5 // pred_check_branch
        %727 = sbr.rel (%p725) target = $region60
      $region59: #{tpu_custom_call.1} parent=5 // pred_region
        %s728 = ssub.s32 %s22, 2
        // Predicated region
        $region61: #{tpu_custom_call.1} parent=59 // pred_check
          %p729 = pneg %p188
        $region62: #{tpu_custom_call.1} parent=59 // pred_check_branch
          %731 = sbr.rel (%p729) target = $region64
        $region63: #{tpu_custom_call.1} parent=59 // pred_region
          %s732 = sand.u32 %s173, 1
          %s733 = scalar_lea.sflag [#allocation4], %s732
          %s734 = sand.u32 %s173, 1
          %s735 = smul.addr %s734, 8
          %s736 = scalar_lea.vmem [#allocation10], %s735
          %738 = dma.done %s733, 128
        $region64: #{tpu_custom_call.1} parent=59 // pred_fallthru
          _
      $region60: #{tpu_custom_call.1} parent=5 // pred_fallthru
        _
    $region6: #{tpu_custom_call.1} parent=1 // loop_footer
      %s26 = sadd.s32 1, %s22
    $region7: #{tpu_custom_call.1} parent=1 // loop_footer_branch
      %21 = sbr.rel target = $region3
    $region8: #{tpu_custom_call.1} parent=1 // loop_exit
      _
    %739 = vsyncpa [#allocation3], 1
    %s740 = scalar_lea.sflag [#allocation3], 1
    %741 = vsyncpa %s740, 1
    %742 = vsyncpa [#allocation6], 1
    %s743 = scalar_lea.sflag [#allocation6], 1
    %744 = vsyncpa %s743, 1
    %745 = vsyncpa [#allocation9], 1
    %s746 = scalar_lea.sflag [#allocation9], 1
    %747 = vsyncpa %s746, 1
    %748 = vsyncpa [#allocation4], 1
    %s749 = scalar_lea.sflag [#allocation4], 1
    %750 = vsyncpa %s749, 1

</llo_original>
